<compile_context>
chip_gen: v7x
topology: tpu7x:2x2x1
jax: 0.10.0
libtpu: 0.0.40
codegen_flags: <defaults>
</compile_context>

<pallas_src>
import jax
import jax.numpy as jnp
from jax import lax
from jax.experimental import pallas as pl
from jax.experimental.pallas import tpu as pltpu


def _embed_onehot_kernel(labels_ref, table_ref, out_ref):
    """One grid step: embed TB labels via a one-hot matmul on the MXU.

    labels_ref : VMEM (TB, 1) int32     -- labels for this block
    table_ref  : VMEM (rows, H_pad)     -- full table, VMEM-resident
    out_ref    : VMEM (TB, H_pad)       -- dense output block
    """
    rows = table_ref.shape[0]
    tb = out_ref.shape[0]
    labels = labels_ref[...]                                   # (TB, 1)
    col = lax.broadcasted_iota(jnp.int32, (tb, rows), 1)       # (TB, rows)
    one_hot = (labels == col).astype(table_ref.dtype)          # (TB, rows)
    # Note: if the table ever contains inf/NaN rows (checkpoint load), the
    # 0 * x terms of the matmul would propagate NaN; fine for N(0,1) init.
    out_ref[...] = jnp.dot(
        one_hot, table_ref[...], preferred_element_type=jnp.float32
    ).astype(out_ref.dtype)


@jax.jit
def _embedding_lookup_pallas(labels, table):
    """out[b, :] = table[labels[b], :] with a VMEM-resident table."""
    batch = labels.shape[0]
    rows, hidden = table.shape
    itemsize = jnp.dtype(table.dtype).itemsize

    # Lane-dense hidden dim (multiple of 128) -> unmasked full-vreg stores.
    hidden_p = ((hidden + 127) // 128) * 128
    if hidden_p != hidden:
        table = jnp.pad(table, ((0, 0), (0, hidden_p - hidden)))

    # Sublane-dense batch blocking; big TB amortizes per-grid-step overhead.
    labels = labels.astype(jnp.int32)
    batch_p8 = ((batch + 7) // 8) * 8
    tb = min(512, batch_p8)                       # multiple of 8 by construction
    batch_p = ((batch_p8 + tb - 1) // tb) * tb
    if batch_p != batch:
        labels = jnp.pad(labels, (0, batch_p - batch))  # pad labels with 0
    labels2d = labels.reshape(batch_p, 1)

    grid = (batch_p // tb,)

    # VMEM budget: single-buffered resident table + double-buffered
    # label/output blocks + margin.  Always passed explicitly (v5e's default
    # scoped window is only 16 MiB).
    table_bytes = rows * hidden_p * itemsize
    out_block_bytes = tb * hidden_p * itemsize
    label_block_bytes = tb * 4
    needed = table_bytes + 2 * (out_block_bytes + label_block_bytes) + (2 << 20)
    vmem_limit = int(min(needed, 128 << 20))
    # TODO(synk): tables larger than ~half the per-core VMEM (64 MiB/TC on v7x)
    # should add a hidden-dim grid axis (marked "arbitrary") so only a
    # (rows, TH) slab is resident instead of the whole table.

    # Tiny grids: keep the work on one core so megacore "parallel" does not
    # duplicate the dominant cost (the full-table HBM DMA) on v7x.
    semantics = ("arbitrary",) if grid[0] <= 4 else ("parallel",)

    cost = pl.CostEstimate(
        flops=2 * batch_p * rows * hidden_p,
        transcendentals=0,
        bytes_accessed=table_bytes + batch_p * hidden_p * itemsize + batch_p * 4,
    )

    grid_spec = pltpu.PrefetchScalarGridSpec(
        num_scalar_prefetch=0,
        grid=grid,
        in_specs=[
            # Labels for this block: (TB, 1) int32.
            pl.BlockSpec((tb, 1), lambda i: (i, 0)),
            # Full table, constant block index -> fetched once, VMEM-resident.
            # Single-buffered: a constant block gains nothing from a 2nd buffer.
            pl.BlockSpec(
                (rows, hidden_p),
                lambda i: (0, 0),
                pipeline_mode=pl.Buffered(buffer_count=1),
            ),
        ],
        out_specs=pl.BlockSpec((tb, hidden_p), lambda i: (i, 0)),
    )

    out = pl.pallas_call(
        _embed_onehot_kernel,
        out_shape=jax.ShapeDtypeStruct((batch_p, hidden_p), table.dtype),
        grid_spec=grid_spec,
        compiler_params=pltpu.CompilerParams(
            dimension_semantics=semantics,
            vmem_limit_bytes=vmem_limit,
        ),
        cost_estimate=cost,
    )(labels2d, table)

    return out[:batch, :hidden]


class LabelEmbedder:
    """JAX/Pallas port of the PyTorch LabelEmbedder module."""

    def __init__(self, num_classes, hidden_size, dropout_prob, *, param_key,
                 dtype=jnp.float32):
        use_cfg_embedding = int(dropout_prob > 0)
        # nn.Embedding default init: N(0, 1).  Pass dtype=jnp.bfloat16 to halve
        # the resident-table VMEM footprint / DMA bytes when the downstream
        # DiT runs in bf16 (bf16 is also the native MXU input on v6e/v7x).
        self.embedding_table = jax.random.normal(
            param_key, (num_classes + use_cfg_embedding, hidden_size)
        ).astype(dtype)
        self.num_classes = num_classes
        self.hidden_size = hidden_size
        self.dropout_prob = dropout_prob

    def token_drop(self, labels, force_drop_ids=None, *, rng=None):
        if force_drop_ids is None:
            if rng is None:
                raise ValueError(
                    "token_drop with random dropout requires an `rng` key"
                )
            drop_ids = (
                jax.random.uniform(rng, (labels.shape[0],)) < self.dropout_prob
            )
        else:
            drop_ids = force_drop_ids == 1
        # Note: if dropout_prob == 0 there is no CFG row; a dropped label
        # (== num_classes) then matches no one-hot column and embeds to zeros
        # instead of raising like PyTorch would.
        return jnp.where(drop_ids, self.num_classes, labels)

    def __call__(self, labels, train, force_drop_ids=None, *, rng=None):
        use_dropout = self.dropout_prob > 0
        if (train and use_dropout) or (force_drop_ids is not None):
            labels = self.token_drop(labels, force_drop_ids, rng=rng)
        return _embedding_lookup_pallas(labels, self.embedding_table)


if __name__ == "__main__":
    key = jax.random.PRNGKey(0)
    k_param, k_labels, k_drop = jax.random.split(key, 3)

    num_classes = 10
    hidden_size = 128   # lane-friendly hidden dim
    dropout_prob = 0.1
    batch = 10          # not a multiple of 8 -> exercises batch padding path

    embedder = LabelEmbedder(
        num_classes, hidden_size, dropout_prob, param_key=k_param
    )

    labels = jax.random.randint(k_labels, (batch,), 0, num_classes, jnp.int32)

    # Eval-mode forward (no dropout): deterministic, easy to check.
    out_eval = jax.block_until_ready(embedder(labels, train=False))
    ref_eval = jnp.take(embedder.embedding_table, labels, axis=0)
    assert out_eval.shape == (batch, hidden_size)
    assert jnp.allclose(out_eval, ref_eval), "eval-mode mismatch"

    # Train-mode forward with CFG token dropout (random drop ids).
    out_train = jax.block_until_ready(embedder(labels, train=True, rng=k_drop))
    assert out_train.shape == (batch, hidden_size)

    # Forced-drop path (force_drop_ids == 1 -> null class embedding row).
    force_drop_ids = jnp.array([1, 0] * (batch // 2), dtype=jnp.int32)
    out_forced = jax.block_until_ready(
        embedder(labels, train=False, force_drop_ids=force_drop_ids)
    )
    forced_labels = jnp.where(force_drop_ids == 1, num_classes, labels)
    ref_forced = jnp.take(embedder.embedding_table, forced_labels, axis=0)
    assert jnp.allclose(out_forced, ref_forced), "forced-drop mismatch"

    print("KERNEL_OK")
</pallas_src>

<mosaic_0001>
module attributes {stable_mosaic.version = 11 : i64} {
  func.func @_embed_onehot_kernel(%arg0: i32, %arg1: memref<16x1xi32, #tpu.memory_space<vmem>>, %arg2: memref<11x128xf32, #tpu.memory_space<vmem>>, %arg3: memref<16x128xf32, #tpu.memory_space<vmem>>) attributes {dimension_semantics = [#tpu.dimension_semantics<arbitrary>], iteration_bounds = array<i64: 1>, scalar_prefetch = 0 : i64, scratch_operands = 0 : i64, tpu.core_type = #tpu.core_type<tc>, window_params = [{transform_indices = @transform_0, window_bounds = array<i64: 16, 1>}, {pipeline_mode = #tpu.pipeline_mode<synchronous>, transform_indices = @transform_1, window_bounds = array<i64: 11, 128>}, {transform_indices = @transform_2, window_bounds = array<i64: 16, 128>}]} {
    %c0 = arith.constant 0 : index
    %c0_0 = arith.constant 0 : index
    %0 = vector.load %arg1[%c0, %c0_0] : memref<16x1xi32, #tpu.memory_space<vmem>>, vector<16x1xi32>
    %1 = tpu.iota {dimensions = array<i32: 1>} : vector<16x11xi32>
    %2 = vector.broadcast %0 : vector<16x1xi32> to vector<16x11xi32>
    %3 = arith.cmpi eq, %2, %1 : vector<16x11xi32>
    %4 = arith.extui %3 : vector<16x11xi1> to vector<16x11xi32>
    %5 = arith.sitofp %4 : vector<16x11xi32> to vector<16x11xf32>
    %c0_1 = arith.constant 0 : index
    %c0_2 = arith.constant 0 : index
    %6 = vector.load %arg2[%c0_1, %c0_2] : memref<11x128xf32, #tpu.memory_space<vmem>>, vector<11x128xf32>
    %cst = arith.constant dense<0.000000e+00> : vector<16x128xf32>
    %7 = tpu.matmul %5, %6, %cst {dimension_numbers = #tpu.dot_dimension_numbers<[1], [0], [0], [1], [0, 0, 1, 1], [], []>} : vector<16x11xf32>, vector<11x128xf32>, vector<16x128xf32> -> vector<16x128xf32>
    %c0_3 = arith.constant 0 : index
    %c0_4 = arith.constant 0 : index
    %8 = vector.load %arg3[%c0_3, %c0_4] : memref<16x128xf32, #tpu.memory_space<vmem>>, vector<16x128xf32>
    tpu.vector_store %arg3[%c0_3, %c0_4], %7 {strides = array<i32>} : memref<16x128xf32, #tpu.memory_space<vmem>>, vector<16x128xf32>,
    return
  }
  func.func @transform_0(%arg0: i32) -> (i32, i32) {
    %c0_i32 = arith.constant 0 : i32
    %c0_i32_0 = arith.constant 0 : i32
    return %arg0, %c0_i32 : i32, i32
  }
  func.func @transform_1(%arg0: i32) -> (i32, i32) {
    %c0_i32 = arith.constant 0 : i32
    %c0_i32_0 = arith.constant 0 : i32
    %c0_i32_1 = arith.constant 0 : i32
    return %c0_i32, %c0_i32_0 : i32, i32
  }
  func.func @transform_2(%arg0: i32) -> (i32, i32) {
    %c0_i32 = arith.constant 0 : i32
    %c0_i32_0 = arith.constant 0 : i32
    return %arg0, %c0_i32 : i32, i32
  }
}

</mosaic_0001>

<llo_original>
// kernel: _embedding_lookup_pallas.1
$region0: #{_embedding_lookup_pallas.1}
  #allocation0 [shape = 'u32[]', space=smem, size = 0x4, offset = 0x4, fixed_abs, tag = 'smem constant byte address 0x4 - core index']
  #allocation1 [shape = 'u32[144,128]{1,0:T(1,128)}', space=vmem, size = 0x12000, scoped, tag = 'internal scratch']
  %s0 = inlined_call_operand.vmem [shape: s32[16,1], index: 0, kind: input, shape index: {}]
  %s1 = inlined_call_operand.vmem [shape: f32[11,128], index: 1, kind: input, shape index: {}]
  %s2 = inlined_call_operand.hbm [shape: f32[16,128], index: 2, kind: output, shape index: {}]
  %s3 = sld [smem:[#allocation0]]
  $region18: #{_embedding_lookup_pallas.1} parent=0
    _
  %s5 = ssub.s32 1, %s3
  %s6 = scalar_select 0, %s5, %s3
  $region1: #{_embedding_lookup_pallas.1} parent=0
    #allocation2 [shape = 'u8[8192]{0}', space=vmem, size = 0x2000, scoped, tag = 'output window, operand 0, single buffered']
    #allocation3 [shape = 's32[1]{0}', space=sflag, size = 0x4, scoped, tag = 'scoped memory for _embedding_lookup_pallas.1']
    %7 = vsyncpa [#allocation3], 0
    // Predicated region
    $region2: #{_embedding_lookup_pallas.1} parent=1 // pred_check
      _
    $region3: #{_embedding_lookup_pallas.1} parent=1 // pred_check_branch
      %9 = sbr.rel (0) target = $region5
    $region4: #{_embedding_lookup_pallas.1} parent=1 // pred_region
      _
    $region5: #{_embedding_lookup_pallas.1} parent=1 // pred_fallthru
      _
    // Predicated region
    $region6: #{_embedding_lookup_pallas.1} parent=1 // pred_check
      _
    $region7: #{_embedding_lookup_pallas.1} parent=1 // pred_check_branch
      %11 = sbr.rel (0) target = $region9
    $region8: #{_embedding_lookup_pallas.1} parent=1 // pred_region
      _
    $region9: #{_embedding_lookup_pallas.1} parent=1 // pred_fallthru
      _
    %v12 = vld [vmem:[%s0] sm:$0xff]
    %v13 = vld [vmem:[%s0 + $0x8] sm:$0xff]
    %v14 = vlaneseq
    %v15 = vand.u32 %v14, 127
    %16 = vset.pattern.permute.xlu0 0
    %17 = vperm.xlu0 %16, %v12
    %v18 = vpop.permute.xlu0 %17
    %19 = vset.pattern.permute.xlu0 0
    %20 = vperm.xlu0 %19, %v13
    %v21 = vpop.permute.xlu0 %20
    %vm22 = vcmp.eq.s32.totalorder %v18, %v15
    %vm23 = vcmp.eq.s32.totalorder %v21, %v15
    %v24 = vsel %vm22, 1, 0
    %v25 = vsel %vm23, 1, 0
    %v26 = vcvt.s32.f32 %v24
    %v27 = vcvt.s32.f32 %v25
    %v28 = vld [vmem:[%s1] sm:$0xff]
    %v29 = vld [vmem:[%s1 + $0x8] sm:$0x7]
    %vm30 = vcmask 89088
    %v32 = vsel %vm30, %v26, 0
    %v35 = vsel %vm30, %v27, 0
    %vm37 = vcmask 1042432
    %v39 = vsel %vm37, %v29, 0
    %41 = vmatprep.subr.mxu0 0.0
    %42 = vmatpush1.msra.mxu0 %v28
    %43 = vmatprep.subr.mxu0 0.0
    %44 = vmatpush1.msra.mxu0 %v39
    %45 = vmatprep.subr.mxu0 0.0
    %46 = vmatpush1.msra.mxu0 0.0
    %47 = vmatprep.subr.mxu0 0.0
    %48 = vmatpush1.msra.mxu0 0.0
    %49 = vmatprep.subr.mxu0 0.0
    %50 = vmatpush1.msra.mxu0 0.0
    %51 = vmatprep.subr.mxu0 0.0
    %52 = vmatpush1.msra.mxu0 0.0
    %53 = vmatprep.subr.mxu0 0.0
    %54 = vmatpush1.msra.mxu0 0.0
    %55 = vmatprep.subr.mxu0 0.0
    %56 = vmatpush1.msra.mxu0 0.0
    %57 = vmatprep.subr.mxu0 0.0
    %58 = vmatpush1.msra.mxu0 0.0
    %59 = vmatprep.subr.mxu0 0.0
    %60 = vmatpush1.msra.mxu0 0.0
    %61 = vmatprep.subr.mxu0 0.0
    %62 = vmatpush1.msra.mxu0 0.0
    %63 = vmatprep.subr.mxu0 0.0
    %64 = vmatpush1.msra.mxu0 0.0
    %65 = vmatprep.subr.mxu0 0.0
    %66 = vmatpush1.msra.mxu0 0.0
    %67 = vmatprep.subr.mxu0 0.0
    %68 = vmatpush1.msra.mxu0 0.0
    %69 = vmatprep.subr.mxu0 0.0
    %70 = vmatpush1.msra.mxu0 0.0
    %71 = vmatprep.subr.mxu0 0.0
    %72 = vmatpush1.msra.mxu0 0.0
    %73 = vmatprep.subr.mxu0 0.0
    %74 = vmatpush1.msra.mxu0 0.0
    %75 = vmatprep.subr.mxu0 0.0
    %76 = vmatpush1.msra.mxu0 0.0
    %77 = vmatprep.subr.mxu0 0.0
    %78 = vmatpush1.msra.mxu0 0.0
    %79 = vmatprep.subr.mxu0 0.0
    %80 = vmatpush1.msra.mxu0 0.0
    %81 = vmatprep.subr.mxu0 0.0
    %82 = vmatpush1.msra.mxu0 0.0
    %83 = vmatprep.subr.mxu0 0.0
    %84 = vmatpush1.msra.mxu0 0.0
    %85 = vmatprep.subr.mxu0 0.0
    %86 = vmatpush1.msra.mxu0 0.0
    %87 = vmatprep.subr.mxu0 0.0
    %88 = vmatpush1.msra.mxu0 0.0
    %89 = vmatprep.subr.mxu0 0.0
    %90 = vmatpush1.msra.mxu0 0.0
    %91 = vmatprep.subr.mxu0 0.0
    %92 = vmatpush1.msra.mxu0 0.0
    %93 = vmatprep.subr.mxu0 0.0
    %94 = vmatpush1.msra.mxu0 0.0
    %95 = vmatprep.subr.mxu0 0.0
    %96 = vmatpush1.msra.mxu0 0.0
    %97 = vmatprep.subr.mxu0 0.0
    %98 = vmatpush1.msra.mxu0 0.0
    %99 = vmatprep.subr.mxu0 0.0
    %100 = vmatpush1.msra.mxu0 0.0
    %101 = vmatprep.subr.mxu0 0.0
    %102 = vmatpush1.msra.mxu0 0.0
    %103 = vmatprep.subr.mxu0 0.0
    %104 = vmatpush1.msra.mxu0 0.0
    %105 = vmatprep.mubr.f32.mxu0 0.0
    %106 = vmatmul.mubr.f32.gmra.mrb[0].mxu0 %v32
    %v107 = vpop.f32.mrb[0].mxu0
    %v108 = vadd.f32 0.0, %v107
    %v109 = vpop.f32.mrb[0].mxu0
    %110 = vmatprep.mubr.f32.mxu0 0.0
    %111 = vmatmul.mubr.f32.gmra.mrb[0].mxu0 %v35
    %v112 = vpop.f32.mrb[0].mxu0
    %v113 = vadd.f32 0.0, %v112
    %v114 = vpop.f32.mrb[0].mxu0
    %115 = vdwg.mxu0
    %116 = vst [vmem:[#allocation2] sm:$0xff] %v108
    %117 = vst [vmem:[#allocation2 + $0x8] sm:$0xff] %v113
    // Predicated region
    $region10: #{_embedding_lookup_pallas.1} parent=1 // pred_check
      _
    $region11: #{_embedding_lookup_pallas.1} parent=1 // pred_check_branch
      %119 = sbr.rel (0) target = $region13
    $region12: #{_embedding_lookup_pallas.1} parent=1 // pred_region
      %s121 = ssub.s32 256, 256
      %122 = vsyncadd [#allocation3], %s121
      %s123 = sshll.u32 [#allocation2], 4
      %s124 = int_to_ptr.vmem [resolvable:$true] %s123
      %129 = dma.vmem_to_hbm [thread:$0]  %s124, 256, %s2, [#allocation3], 128, 128, 8
    $region13: #{_embedding_lookup_pallas.1} parent=1 // pred_fallthru
      _
    // Predicated region
    $region14: #{_embedding_lookup_pallas.1} parent=1 // pred_check
      _
    $region15: #{_embedding_lookup_pallas.1} parent=1 // pred_check_branch
      %131 = sbr.rel (0) target = $region17
    $region16: #{_embedding_lookup_pallas.1} parent=1 // pred_region
      %132 = dma.done [#allocation3], 256
    $region17: #{_embedding_lookup_pallas.1} parent=1 // pred_fallthru
      _
    %133 = vsyncpa [#allocation3], 1

</llo_original>
